<compile_context>
chip_gen: v7x
topology: tpu7x:2x2x1
jax: 0.10.0
libtpu: 0.0.40
codegen_flags: <defaults>
</compile_context>

<pallas_src>
import jax
import jax.numpy as jnp
from jax.experimental import pallas as pl
from jax.experimental.pallas import tpu as pltpu

CPAD = 128  # lane-padded class dimension per head

# answer-space sizes (synthetic, deterministic stand-in for create_ans_space)
HEAD_SPACES = {
    "age": 6,
    "race": 3,
    "masked": 2,
    "skintone": 4,
    "emotion": 7,
    "gender": 2,
}
HEAD_NAMES = list(HEAD_SPACES.keys())
NUM_HEADS = len(HEAD_NAMES)


def _heads_kernel(counts_ref, x_ref, w_ref, b_ref, onehot_ref,
                  logp_ref, loss_ref):
    """All 6 classification heads in one kernel invocation.

    counts_ref: SMEM (H,)            int32 -- valid classes per head
    x_ref:      VMEM (B, S, D)       f32   -- encoded features
    w_ref:      VMEM (D, H*CPAD)     f32   -- all heads' weights, lane-packed
    b_ref:      VMEM (1, H*CPAD)     f32   -- all heads' biases, lane-packed
    onehot_ref: VMEM (B, H*CPAD)     f32   -- one-hot labels, lane-packed
    logp_ref:   VMEM (B, H*CPAD)     f32   -- log-probs (padding lanes = 0)
    loss_ref:   VMEM (1, CPAD)       f32   -- lane h holds head h's CE loss
    """
    B = x_ref.shape[0]
    S = x_ref.shape[1]

    # Sequence mean, computed exactly once (mean commutes with the linear head).
    x = x_ref[...].astype(jnp.float32)                    # (B, S, D)
    pooled = jnp.sum(x, axis=1) * jnp.float32(1.0 / S)    # (B, D)

    # One fused matmul for all heads: (B, D) x (D, H*CPAD).
    logits = jnp.dot(pooled, w_ref[...],
                     preferred_element_type=jnp.float32) + b_ref[...]

    onehot = onehot_ref[...]                              # (B, H*CPAD)
    col = jax.lax.broadcasted_iota(jnp.int32, (B, CPAD), 1)
    lane = jax.lax.broadcasted_iota(jnp.int32, (1, CPAD), 1)
    neg = jnp.float32(-1e30)
    inv_b = jnp.float32(1.0 / B)

    lp_blocks = []
    loss_row = jnp.zeros((1, CPAD), jnp.float32)
    for h in range(NUM_HEADS):                            # static unroll, H = 6
        lo = h * CPAD
        z = logits[:, lo:lo + CPAD]                       # (B, CPAD)
        valid = col < counts_ref[h]

        # masked log_softmax over the head's (padded) class lanes
        zm = jnp.where(valid, z, neg)
        m = jnp.max(zm, axis=-1, keepdims=True)
        e = jnp.where(valid, jnp.exp(zm - m), 0.0)
        lp = zm - m - jnp.log(jnp.sum(e, axis=-1, keepdims=True))

        lp_blocks.append(jnp.where(valid, lp, 0.0))

        # NLL: -mean_b lp[b, label_b]  (CrossEntropyLoss's extra log_softmax
        # is a no-op on log-probs, so lp is used directly)
        picked = jnp.sum(lp * onehot[:, lo:lo + CPAD])
        loss_h = -picked * inv_b
        loss_row = loss_row + jnp.where(lane == h, loss_h, 0.0)

    logp_ref[...] = jnp.concatenate(lp_blocks, axis=-1)   # single wide store
    loss_ref[...] = loss_row


def multi_task_heads(encoded, w_packed, b_packed, counts, labels):
    """Run all 6 heads. Returns (log_probs (B, H*CPAD), per-head losses (H,))."""
    B, S, D = encoded.shape
    H = counts.shape[0]

    # one-hot label slab aligned with the packed logits layout
    onehot = jnp.concatenate(
        [jax.nn.one_hot(labels[h], CPAD, dtype=jnp.float32) for h in range(H)],
        axis=-1)                                           # (B, H*CPAD)

    logp, loss_row = pl.pallas_call(
        _heads_kernel,
        out_shape=(
            jax.ShapeDtypeStruct((B, H * CPAD), jnp.float32),
            jax.ShapeDtypeStruct((1, CPAD), jnp.float32),
        ),
        in_specs=[
            pl.BlockSpec(memory_space=pltpu.MemorySpace.SMEM),   # counts
            pl.BlockSpec(memory_space=pltpu.MemorySpace.VMEM),   # encoded
            pl.BlockSpec(memory_space=pltpu.MemorySpace.VMEM),   # w_packed
            pl.BlockSpec(memory_space=pltpu.MemorySpace.VMEM),   # b_packed
            pl.BlockSpec(memory_space=pltpu.MemorySpace.VMEM),   # onehot
        ],
        out_specs=(
            pl.BlockSpec(memory_space=pltpu.MemorySpace.VMEM),
            pl.BlockSpec(memory_space=pltpu.MemorySpace.VMEM),
        ),
    )(counts, encoded, w_packed, b_packed, onehot)
    return logp, loss_row[0, :H]


def make_params(key, intermediate_dims):
    """Deterministic nn.Linear-style parameters for each head."""
    ws, bs = {}, {}
    for name in HEAD_NAMES:
        key, kw, kb = jax.random.split(key, 3)
        c = HEAD_SPACES[name]
        ws[name] = 0.1 * jax.random.normal(kw, (c, intermediate_dims), jnp.float32)
        bs[name] = 0.1 * jax.random.normal(kb, (c,), jnp.float32)
    return ws, bs


def pack_params(ws, bs, intermediate_dims):
    w_packed = jnp.zeros((intermediate_dims, NUM_HEADS * CPAD), jnp.float32)
    b_packed = jnp.zeros((1, NUM_HEADS * CPAD), jnp.float32)
    for h, name in enumerate(HEAD_NAMES):
        c = HEAD_SPACES[name]
        w_packed = w_packed.at[:, h * CPAD:h * CPAD + c].set(ws[name].T)
        b_packed = b_packed.at[0, h * CPAD:h * CPAD + c].set(bs[name])
    return w_packed, b_packed


def reference_forward(encoded, ws, bs, labels):
    """Pure-JAX replica of the PyTorch forward (linear -> mean -> log_softmax -> CE)."""
    logits, losses = {}, {}
    B = encoded.shape[0]
    total = 0.0
    for h, name in enumerate(HEAD_NAMES):
        lin = jnp.einsum("bsd,cd->bsc", encoded, ws[name]) + bs[name]
        head = jax.nn.log_softmax(jnp.mean(lin, axis=1), axis=-1)
        logits[f"head_{name}"] = head
        lp2 = jax.nn.log_softmax(head, axis=-1)   # CrossEntropyLoss's log_softmax
        loss = -jnp.mean(lp2[jnp.arange(B), labels[h]])
        losses[f"loss_{name}"] = loss
        total = total + loss
    losses["loss_total"] = total
    return logits, losses


if __name__ == "__main__":
    B, S, D = 2, 8, 32  # batch, seq (num vision tokens), intermediate_dims

    key = jax.random.PRNGKey(0)
    key, k_enc, k_par, k_lab = jax.random.split(key, 4)

    # stand-in encoder output (see TODO(synk) above)
    encoded = jax.random.normal(k_enc, (B, S, D), jnp.float32)

    ws, bs = make_params(k_par, D)
    w_packed, b_packed = pack_params(ws, bs, D)

    counts = jnp.array([HEAD_SPACES[n] for n in HEAD_NAMES], jnp.int32)
    lab_keys = jax.random.split(k_lab, NUM_HEADS)
    labels = jnp.stack([
        jax.random.randint(lab_keys[h], (B,), 0, HEAD_SPACES[HEAD_NAMES[h]])
        for h in range(NUM_HEADS)
    ]).astype(jnp.int32)                                   # (H, B)

    logp_pad, loss_vec = multi_task_heads(encoded, w_packed, b_packed,
                                          counts, labels)
    logp_pad = jax.block_until_ready(logp_pad)
    loss_vec = jax.block_until_ready(loss_vec)

    # assemble module-style outputs
    logits_out = {
        f"head_{name}": logp_pad[:, h * CPAD:h * CPAD + HEAD_SPACES[name]]
        for h, name in enumerate(HEAD_NAMES)
    }
    loss_out = {f"loss_{name}": loss_vec[h] for h, name in enumerate(HEAD_NAMES)}
    loss_out["loss_total"] = jnp.sum(loss_vec)

    # verify against pure-JAX reference of the PyTorch semantics
    ref_logits, ref_loss = reference_forward(encoded, ws, bs, labels)
    for name in HEAD_NAMES:
        assert jnp.allclose(logits_out[f"head_{name}"],
                            ref_logits[f"head_{name}"], atol=1e-4), name
        assert jnp.allclose(loss_out[f"loss_{name}"],
                            ref_loss[f"loss_{name}"], atol=1e-4), name
    assert jnp.allclose(loss_out["loss_total"], ref_loss["loss_total"], atol=1e-4)

    print("KERNEL_OK")
</pallas_src>

<mosaic_0001>
module attributes {stable_mosaic.version = 11 : i64} {
  func.func @_heads_kernel(%arg0: memref<6xi32, #tpu.memory_space<smem>>, %arg1: memref<2x8x32xf32, #tpu.memory_space<vmem>>, %arg2: memref<32x768xf32, #tpu.memory_space<vmem>>, %arg3: memref<1x768xf32, #tpu.memory_space<vmem>>, %arg4: memref<2x768xf32, #tpu.memory_space<vmem>>, %arg5: memref<2x768xf32, #tpu.memory_space<vmem>>, %arg6: memref<1x128xf32, #tpu.memory_space<vmem>>) attributes {dimension_semantics = [], scalar_prefetch = 0 : i64, scratch_operands = 0 : i64, tpu.core_type = #tpu.core_type<tc>} {
    %c0 = arith.constant 0 : index
    %c0_0 = arith.constant 0 : index
    %c0_1 = arith.constant 0 : index
    %0 = vector.load %arg1[%c0, %c0_0, %c0_1] : memref<2x8x32xf32, #tpu.memory_space<vmem>>, vector<2x8x32xf32>
    %cst = arith.constant dense<0.000000e+00> : vector<2x32xf32>
    %1 = vector.multi_reduction <add>, %0, %cst [1] : vector<2x8x32xf32> to vector<2x32xf32>
    %cst_2 = arith.constant 1.250000e-01 : f32
    %2 = vector.broadcast %cst_2 : f32 to vector<2x32xf32>
    %3 = arith.mulf %1, %2 : vector<2x32xf32>
    %c0_3 = arith.constant 0 : index
    %c0_4 = arith.constant 0 : index
    %4 = vector.load %arg2[%c0_3, %c0_4] : memref<32x768xf32, #tpu.memory_space<vmem>>, vector<32x768xf32>
    %cst_5 = arith.constant dense<0.000000e+00> : vector<2x768xf32>
    %5 = tpu.matmul %3, %4, %cst_5 {dimension_numbers = #tpu.dot_dimension_numbers<[1], [0], [0], [1], [0, 0, 1, 1], [], []>} : vector<2x32xf32>, vector<32x768xf32>, vector<2x768xf32> -> vector<2x768xf32>
    %c0_6 = arith.constant 0 : index
    %c0_7 = arith.constant 0 : index
    %6 = vector.load %arg3[%c0_6, %c0_7] : memref<1x768xf32, #tpu.memory_space<vmem>>, vector<1x768xf32>
    %7 = vector.broadcast %6 : vector<1x768xf32> to vector<2x768xf32>
    %8 = arith.addf %5, %7 : vector<2x768xf32>
    %c0_8 = arith.constant 0 : index
    %c0_9 = arith.constant 0 : index
    %9 = vector.load %arg4[%c0_8, %c0_9] : memref<2x768xf32, #tpu.memory_space<vmem>>, vector<2x768xf32>
    %10 = tpu.iota {dimensions = array<i32: 1>} : vector<2x128xi32>
    %11 = tpu.iota {dimensions = array<i32: 1>} : vector<1x128xi32>
    %cst_10 = arith.constant 0.000000e+00 : f32
    %12 = vector.broadcast %cst_10 : f32 to vector<1x128xf32>
    %13 = vector.extract_strided_slice %8 {offsets = [0, 0], sizes = [2, 128], strides = [1, 1]} : vector<2x768xf32> to vector<2x128xf32>
    %c0_11 = arith.constant 0 : index
    %14 = memref.load %arg0[%c0_11] : memref<6xi32, #tpu.memory_space<smem>>
    %15 = vector.broadcast %14 : i32 to vector<2x128xi32>
    %16 = arith.cmpi slt, %10, %15 : vector<2x128xi32>
    %cst_12 = arith.constant -1.000000e+30 : f32
    %17 = vector.broadcast %cst_12 : f32 to vector<2x128xf32>
    %18 = arith.select %16, %13, %17 : vector<2x128xi1>, vector<2x128xf32>
    %cst_13 = arith.constant dense<0xFF800000> : vector<2xf32>
    %19 = vector.multi_reduction <maximumf>, %18, %cst_13 [1] : vector<2x128xf32> to vector<2xf32>
    %20 = vector.shape_cast %19 : vector<2xf32> to vector<2x1xf32>
    %21 = vector.broadcast %20 : vector<2x1xf32> to vector<2x128xf32>
    %22 = arith.subf %18, %21 : vector<2x128xf32>
    %23 = math.exp %22 : vector<2x128xf32>
    %cst_14 = arith.constant 0.000000e+00 : f32
    %24 = vector.broadcast %cst_14 : f32 to vector<2x128xf32>
    %25 = arith.select %16, %23, %24 : vector<2x128xi1>, vector<2x128xf32>
    %26 = vector.broadcast %20 : vector<2x1xf32> to vector<2x128xf32>
    %27 = arith.subf %18, %26 : vector<2x128xf32>
    %cst_15 = arith.constant dense<0.000000e+00> : vector<2xf32>
    %28 = vector.multi_reduction <add>, %25, %cst_15 [1] : vector<2x128xf32> to vector<2xf32>
    %29 = vector.shape_cast %28 : vector<2xf32> to vector<2x1xf32>
    %30 = math.log %29 : vector<2x1xf32>
    %31 = vector.broadcast %30 : vector<2x1xf32> to vector<2x128xf32>
    %32 = arith.subf %27, %31 : vector<2x128xf32>
    %cst_16 = arith.constant 0.000000e+00 : f32
    %33 = vector.broadcast %cst_16 : f32 to vector<2x128xf32>
    %34 = arith.select %16, %32, %33 : vector<2x128xi1>, vector<2x128xf32>
    %35 = vector.extract_strided_slice %9 {offsets = [0, 0], sizes = [2, 128], strides = [1, 1]} : vector<2x768xf32> to vector<2x128xf32>
    %36 = arith.mulf %32, %35 : vector<2x128xf32>
    %37 = vector.shape_cast %36 : vector<2x128xf32> to vector<1x2x128xf32>
    %cst_17 = arith.constant dense<0.000000e+00> : vector<1xf32>
    %38 = vector.multi_reduction <add>, %37, %cst_17 [1, 2] : vector<1x2x128xf32> to vector<1xf32>
    %39 = vector.shape_cast %38 : vector<1xf32> to vector<1x1x1xf32>
    %40 = vector.extract %39[0, 0, 0] : f32 from vector<1x1x1xf32>
    %cst_18 = arith.constant 0.000000e+00 : f32
    %41 = arith.subf %cst_18, %40 : f32
    %cst_19 = arith.constant 5.000000e-01 : f32
    %42 = arith.mulf %41, %cst_19 : f32
    %c0_i32 = arith.constant 0 : i32
    %43 = vector.broadcast %c0_i32 : i32 to vector<1x128xi32>
    %44 = arith.cmpi eq, %11, %43 : vector<1x128xi32>
    %cst_20 = arith.constant 0.000000e+00 : f32
    %45 = vector.broadcast %42 : f32 to vector<1x128xf32>
    %46 = vector.broadcast %cst_20 : f32 to vector<1x128xf32>
    %47 = arith.select %44, %45, %46 : vector<1x128xi1>, vector<1x128xf32>
    %48 = arith.addf %12, %47 : vector<1x128xf32>
    %49 = vector.extract_strided_slice %8 {offsets = [0, 128], sizes = [2, 128], strides = [1, 1]} : vector<2x768xf32> to vector<2x128xf32>
    %c1 = arith.constant 1 : index
    %50 = memref.load %arg0[%c1] : memref<6xi32, #tpu.memory_space<smem>>
    %51 = vector.broadcast %50 : i32 to vector<2x128xi32>
    %52 = arith.cmpi slt, %10, %51 : vector<2x128xi32>
    %cst_21 = arith.constant -1.000000e+30 : f32
    %53 = vector.broadcast %cst_21 : f32 to vector<2x128xf32>
    %54 = arith.select %52, %49, %53 : vector<2x128xi1>, vector<2x128xf32>
    %cst_22 = arith.constant dense<0xFF800000> : vector<2xf32>
    %55 = vector.multi_reduction <maximumf>, %54, %cst_22 [1] : vector<2x128xf32> to vector<2xf32>
    %56 = vector.shape_cast %55 : vector<2xf32> to vector<2x1xf32>
    %57 = vector.broadcast %56 : vector<2x1xf32> to vector<2x128xf32>
    %58 = arith.subf %54, %57 : vector<2x128xf32>
    %59 = math.exp %58 : vector<2x128xf32>
    %cst_23 = arith.constant 0.000000e+00 : f32
    %60 = vector.broadcast %cst_23 : f32 to vector<2x128xf32>
    %61 = arith.select %52, %59, %60 : vector<2x128xi1>, vector<2x128xf32>
    %62 = vector.broadcast %56 : vector<2x1xf32> to vector<2x128xf32>
    %63 = arith.subf %54, %62 : vector<2x128xf32>
    %cst_24 = arith.constant dense<0.000000e+00> : vector<2xf32>
    %64 = vector.multi_reduction <add>, %61, %cst_24 [1] : vector<2x128xf32> to vector<2xf32>
    %65 = vector.shape_cast %64 : vector<2xf32> to vector<2x1xf32>
    %66 = math.log %65 : vector<2x1xf32>
    %67 = vector.broadcast %66 : vector<2x1xf32> to vector<2x128xf32>
    %68 = arith.subf %63, %67 : vector<2x128xf32>
    %cst_25 = arith.constant 0.000000e+00 : f32
    %69 = vector.broadcast %cst_25 : f32 to vector<2x128xf32>
    %70 = arith.select %52, %68, %69 : vector<2x128xi1>, vector<2x128xf32>
    %71 = vector.extract_strided_slice %9 {offsets = [0, 128], sizes = [2, 128], strides = [1, 1]} : vector<2x768xf32> to vector<2x128xf32>
    %72 = arith.mulf %68, %71 : vector<2x128xf32>
    %73 = vector.shape_cast %72 : vector<2x128xf32> to vector<1x2x128xf32>
    %cst_26 = arith.constant dense<0.000000e+00> : vector<1xf32>
    %74 = vector.multi_reduction <add>, %73, %cst_26 [1, 2] : vector<1x2x128xf32> to vector<1xf32>
    %75 = vector.shape_cast %74 : vector<1xf32> to vector<1x1x1xf32>
    %76 = vector.extract %75[0, 0, 0] : f32 from vector<1x1x1xf32>
    %cst_27 = arith.constant 0.000000e+00 : f32
    %77 = arith.subf %cst_27, %76 : f32
    %cst_28 = arith.constant 5.000000e-01 : f32
    %78 = arith.mulf %77, %cst_28 : f32
    %c1_i32 = arith.constant 1 : i32
    %79 = vector.broadcast %c1_i32 : i32 to vector<1x128xi32>
    %80 = arith.cmpi eq, %11, %79 : vector<1x128xi32>
    %cst_29 = arith.constant 0.000000e+00 : f32
    %81 = vector.broadcast %78 : f32 to vector<1x128xf32>
    %82 = vector.broadcast %cst_29 : f32 to vector<1x128xf32>
    %83 = arith.select %80, %81, %82 : vector<1x128xi1>, vector<1x128xf32>
    %84 = arith.addf %48, %83 : vector<1x128xf32>
    %85 = vector.extract_strided_slice %8 {offsets = [0, 256], sizes = [2, 128], strides = [1, 1]} : vector<2x768xf32> to vector<2x128xf32>
    %c2 = arith.constant 2 : index
    %86 = memref.load %arg0[%c2] : memref<6xi32, #tpu.memory_space<smem>>
    %87 = vector.broadcast %86 : i32 to vector<2x128xi32>
    %88 = arith.cmpi slt, %10, %87 : vector<2x128xi32>
    %cst_30 = arith.constant -1.000000e+30 : f32
    %89 = vector.broadcast %cst_30 : f32 to vector<2x128xf32>
    %90 = arith.select %88, %85, %89 : vector<2x128xi1>, vector<2x128xf32>
    %cst_31 = arith.constant dense<0xFF800000> : vector<2xf32>
    %91 = vector.multi_reduction <maximumf>, %90, %cst_31 [1] : vector<2x128xf32> to vector<2xf32>
    %92 = vector.shape_cast %91 : vector<2xf32> to vector<2x1xf32>
    %93 = vector.broadcast %92 : vector<2x1xf32> to vector<2x128xf32>
    %94 = arith.subf %90, %93 : vector<2x128xf32>
    %95 = math.exp %94 : vector<2x128xf32>
    %cst_32 = arith.constant 0.000000e+00 : f32
    %96 = vector.broadcast %cst_32 : f32 to vector<2x128xf32>
    %97 = arith.select %88, %95, %96 : vector<2x128xi1>, vector<2x128xf32>
    %98 = vector.broadcast %92 : vector<2x1xf32> to vector<2x128xf32>
    %99 = arith.subf %90, %98 : vector<2x128xf32>
    %cst_33 = arith.constant dense<0.000000e+00> : vector<2xf32>
    %100 = vector.multi_reduction <add>, %97, %cst_33 [1] : vector<2x128xf32> to vector<2xf32>
    %101 = vector.shape_cast %100 : vector<2xf32> to vector<2x1xf32>
    %102 = math.log %101 : vector<2x1xf32>
    %103 = vector.broadcast %102 : vector<2x1xf32> to vector<2x128xf32>
    %104 = arith.subf %99, %103 : vector<2x128xf32>
    %cst_34 = arith.constant 0.000000e+00 : f32
    %105 = vector.broadcast %cst_34 : f32 to vector<2x128xf32>
    %106 = arith.select %88, %104, %105 : vector<2x128xi1>, vector<2x128xf32>
    %107 = vector.extract_strided_slice %9 {offsets = [0, 256], sizes = [2, 128], strides = [1, 1]} : vector<2x768xf32> to vector<2x128xf32>
    %108 = arith.mulf %104, %107 : vector<2x128xf32>
    %109 = vector.shape_cast %108 : vector<2x128xf32> to vector<1x2x128xf32>
    %cst_35 = arith.constant dense<0.000000e+00> : vector<1xf32>
    %110 = vector.multi_reduction <add>, %109, %cst_35 [1, 2] : vector<1x2x128xf32> to vector<1xf32>
    %111 = vector.shape_cast %110 : vector<1xf32> to vector<1x1x1xf32>
    %112 = vector.extract %111[0, 0, 0] : f32 from vector<1x1x1xf32>
    %cst_36 = arith.constant 0.000000e+00 : f32
    %113 = arith.subf %cst_36, %112 : f32
    %cst_37 = arith.constant 5.000000e-01 : f32
    %114 = arith.mulf %113, %cst_37 : f32
    %c2_i32 = arith.constant 2 : i32
    %115 = vector.broadcast %c2_i32 : i32 to vector<1x128xi32>
    %116 = arith.cmpi eq, %11, %115 : vector<1x128xi32>
    %cst_38 = arith.constant 0.000000e+00 : f32
    %117 = vector.broadcast %114 : f32 to vector<1x128xf32>
    %118 = vector.broadcast %cst_38 : f32 to vector<1x128xf32>
    %119 = arith.select %116, %117, %118 : vector<1x128xi1>, vector<1x128xf32>
    %120 = arith.addf %84, %119 : vector<1x128xf32>
    %121 = vector.extract_strided_slice %8 {offsets = [0, 384], sizes = [2, 128], strides = [1, 1]} : vector<2x768xf32> to vector<2x128xf32>
    %c3 = arith.constant 3 : index
    %122 = memref.load %arg0[%c3] : memref<6xi32, #tpu.memory_space<smem>>
    %123 = vector.broadcast %122 : i32 to vector<2x128xi32>
    %124 = arith.cmpi slt, %10, %123 : vector<2x128xi32>
    %cst_39 = arith.constant -1.000000e+30 : f32
    %125 = vector.broadcast %cst_39 : f32 to vector<2x128xf32>
    %126 = arith.select %124, %121, %125 : vector<2x128xi1>, vector<2x128xf32>
    %cst_40 = arith.constant dense<0xFF800000> : vector<2xf32>
    %127 = vector.multi_reduction <maximumf>, %126, %cst_40 [1] : vector<2x128xf32> to vector<2xf32>
    %128 = vector.shape_cast %127 : vector<2xf32> to vector<2x1xf32>
    %129 = vector.broadcast %128 : vector<2x1xf32> to vector<2x128xf32>
    %130 = arith.subf %126, %129 : vector<2x128xf32>
    %131 = math.exp %130 : vector<2x128xf32>
    %cst_41 = arith.constant 0.000000e+00 : f32
    %132 = vector.broadcast %cst_41 : f32 to vector<2x128xf32>
    %133 = arith.select %124, %131, %132 : vector<2x128xi1>, vector<2x128xf32>
    %134 = vector.broadcast %128 : vector<2x1xf32> to vector<2x128xf32>
    %135 = arith.subf %126, %134 : vector<2x128xf32>
    %cst_42 = arith.constant dense<0.000000e+00> : vector<2xf32>
    %136 = vector.multi_reduction <add>, %133, %cst_42 [1] : vector<2x128xf32> to vector<2xf32>
    %137 = vector.shape_cast %136 : vector<2xf32> to vector<2x1xf32>
    %138 = math.log %137 : vector<2x1xf32>
    %139 = vector.broadcast %138 : vector<2x1xf32> to vector<2x128xf32>
    %140 = arith.subf %135, %139 : vector<2x128xf32>
    %cst_43 = arith.constant 0.000000e+00 : f32
    %141 = vector.broadcast %cst_43 : f32 to vector<2x128xf32>
    %142 = arith.select %124, %140, %141 : vector<2x128xi1>, vector<2x128xf32>
    %143 = vector.extract_strided_slice %9 {offsets = [0, 384], sizes = [2, 128], strides = [1, 1]} : vector<2x768xf32> to vector<2x128xf32>
    %144 = arith.mulf %140, %143 : vector<2x128xf32>
    %145 = vector.shape_cast %144 : vector<2x128xf32> to vector<1x2x128xf32>
    %cst_44 = arith.constant dense<0.000000e+00> : vector<1xf32>
    %146 = vector.multi_reduction <add>, %145, %cst_44 [1, 2] : vector<1x2x128xf32> to vector<1xf32>
    %147 = vector.shape_cast %146 : vector<1xf32> to vector<1x1x1xf32>
    %148 = vector.extract %147[0, 0, 0] : f32 from vector<1x1x1xf32>
    %cst_45 = arith.constant 0.000000e+00 : f32
    %149 = arith.subf %cst_45, %148 : f32
    %cst_46 = arith.constant 5.000000e-01 : f32
    %150 = arith.mulf %149, %cst_46 : f32
    %c3_i32 = arith.constant 3 : i32
    %151 = vector.broadcast %c3_i32 : i32 to vector<1x128xi32>
    %152 = arith.cmpi eq, %11, %151 : vector<1x128xi32>
    %cst_47 = arith.constant 0.000000e+00 : f32
    %153 = vector.broadcast %150 : f32 to vector<1x128xf32>
    %154 = vector.broadcast %cst_47 : f32 to vector<1x128xf32>
    %155 = arith.select %152, %153, %154 : vector<1x128xi1>, vector<1x128xf32>
    %156 = arith.addf %120, %155 : vector<1x128xf32>
    %157 = vector.extract_strided_slice %8 {offsets = [0, 512], sizes = [2, 128], strides = [1, 1]} : vector<2x768xf32> to vector<2x128xf32>
    %c4 = arith.constant 4 : index
    %158 = memref.load %arg0[%c4] : memref<6xi32, #tpu.memory_space<smem>>
    %159 = vector.broadcast %158 : i32 to vector<2x128xi32>
    %160 = arith.cmpi slt, %10, %159 : vector<2x128xi32>
    %cst_48 = arith.constant -1.000000e+30 : f32
    %161 = vector.broadcast %cst_48 : f32 to vector<2x128xf32>
    %162 = arith.select %160, %157, %161 : vector<2x128xi1>, vector<2x128xf32>
    %cst_49 = arith.constant dense<0xFF800000> : vector<2xf32>
    %163 = vector.multi_reduction <maximumf>, %162, %cst_49 [1] : vector<2x128xf32> to vector<2xf32>
    %164 = vector.shape_cast %163 : vector<2xf32> to vector<2x1xf32>
    %165 = vector.broadcast %164 : vector<2x1xf32> to vector<2x128xf32>
    %166 = arith.subf %162, %165 : vector<2x128xf32>
    %167 = math.exp %166 : vector<2x128xf32>
    %cst_50 = arith.constant 0.000000e+00 : f32
    %168 = vector.broadcast %cst_50 : f32 to vector<2x128xf32>
    %169 = arith.select %160, %167, %168 : vector<2x128xi1>, vector<2x128xf32>
    %170 = vector.broadcast %164 : vector<2x1xf32> to vector<2x128xf32>
    %171 = arith.subf %162, %170 : vector<2x128xf32>
    %cst_51 = arith.constant dense<0.000000e+00> : vector<2xf32>
    %172 = vector.multi_reduction <add>, %169, %cst_51 [1] : vector<2x128xf32> to vector<2xf32>
    %173 = vector.shape_cast %172 : vector<2xf32> to vector<2x1xf32>
    %174 = math.log %173 : vector<2x1xf32>
    %175 = vector.broadcast %174 : vector<2x1xf32> to vector<2x128xf32>
    %176 = arith.subf %171, %175 : vector<2x128xf32>
    %cst_52 = arith.constant 0.000000e+00 : f32
    %177 = vector.broadcast %cst_52 : f32 to vector<2x128xf32>
    %178 = arith.select %160, %176, %177 : vector<2x128xi1>, vector<2x128xf32>
    %179 = vector.extract_strided_slice %9 {offsets = [0, 512], sizes = [2, 128], strides = [1, 1]} : vector<2x768xf32> to vector<2x128xf32>
    %180 = arith.mulf %176, %179 : vector<2x128xf32>
    %181 = vector.shape_cast %180 : vector<2x128xf32> to vector<1x2x128xf32>
    %cst_53 = arith.constant dense<0.000000e+00> : vector<1xf32>
    %182 = vector.multi_reduction <add>, %181, %cst_53 [1, 2] : vector<1x2x128xf32> to vector<1xf32>
    %183 = vector.shape_cast %182 : vector<1xf32> to vector<1x1x1xf32>
    %184 = vector.extract %183[0, 0, 0] : f32 from vector<1x1x1xf32>
    %cst_54 = arith.constant 0.000000e+00 : f32
    %185 = arith.subf %cst_54, %184 : f32
    %cst_55 = arith.constant 5.000000e-01 : f32
    %186 = arith.mulf %185, %cst_55 : f32
    %c4_i32 = arith.constant 4 : i32
    %187 = vector.broadcast %c4_i32 : i32 to vector<1x128xi32>
    %188 = arith.cmpi eq, %11, %187 : vector<1x128xi32>
    %cst_56 = arith.constant 0.000000e+00 : f32
    %189 = vector.broadcast %186 : f32 to vector<1x128xf32>
    %190 = vector.broadcast %cst_56 : f32 to vector<1x128xf32>
    %191 = arith.select %188, %189, %190 : vector<1x128xi1>, vector<1x128xf32>
    %192 = arith.addf %156, %191 : vector<1x128xf32>
    %193 = vector.extract_strided_slice %8 {offsets = [0, 640], sizes = [2, 128], strides = [1, 1]} : vector<2x768xf32> to vector<2x128xf32>
    %c5 = arith.constant 5 : index
    %194 = memref.load %arg0[%c5] : memref<6xi32, #tpu.memory_space<smem>>
    %195 = vector.broadcast %194 : i32 to vector<2x128xi32>
    %196 = arith.cmpi slt, %10, %195 : vector<2x128xi32>
    %cst_57 = arith.constant -1.000000e+30 : f32
    %197 = vector.broadcast %cst_57 : f32 to vector<2x128xf32>
    %198 = arith.select %196, %193, %197 : vector<2x128xi1>, vector<2x128xf32>
    %cst_58 = arith.constant dense<0xFF800000> : vector<2xf32>
    %199 = vector.multi_reduction <maximumf>, %198, %cst_58 [1] : vector<2x128xf32> to vector<2xf32>
    %200 = vector.shape_cast %199 : vector<2xf32> to vector<2x1xf32>
    %201 = vector.broadcast %200 : vector<2x1xf32> to vector<2x128xf32>
    %202 = arith.subf %198, %201 : vector<2x128xf32>
    %203 = math.exp %202 : vector<2x128xf32>
    %cst_59 = arith.constant 0.000000e+00 : f32
    %204 = vector.broadcast %cst_59 : f32 to vector<2x128xf32>
    %205 = arith.select %196, %203, %204 : vector<2x128xi1>, vector<2x128xf32>
    %206 = vector.broadcast %200 : vector<2x1xf32> to vector<2x128xf32>
    %207 = arith.subf %198, %206 : vector<2x128xf32>
    %cst_60 = arith.constant dense<0.000000e+00> : vector<2xf32>
    %208 = vector.multi_reduction <add>, %205, %cst_60 [1] : vector<2x128xf32> to vector<2xf32>
    %209 = vector.shape_cast %208 : vector<2xf32> to vector<2x1xf32>
    %210 = math.log %209 : vector<2x1xf32>
    %211 = vector.broadcast %210 : vector<2x1xf32> to vector<2x128xf32>
    %212 = arith.subf %207, %211 : vector<2x128xf32>
    %cst_61 = arith.constant 0.000000e+00 : f32
    %213 = vector.broadcast %cst_61 : f32 to vector<2x128xf32>
    %214 = arith.select %196, %212, %213 : vector<2x128xi1>, vector<2x128xf32>
    %215 = vector.extract_strided_slice %9 {offsets = [0, 640], sizes = [2, 128], strides = [1, 1]} : vector<2x768xf32> to vector<2x128xf32>
    %216 = arith.mulf %212, %215 : vector<2x128xf32>
    %217 = vector.shape_cast %216 : vector<2x128xf32> to vector<1x2x128xf32>
    %cst_62 = arith.constant dense<0.000000e+00> : vector<1xf32>
    %218 = vector.multi_reduction <add>, %217, %cst_62 [1, 2] : vector<1x2x128xf32> to vector<1xf32>
    %219 = vector.shape_cast %218 : vector<1xf32> to vector<1x1x1xf32>
    %220 = vector.extract %219[0, 0, 0] : f32 from vector<1x1x1xf32>
    %cst_63 = arith.constant 0.000000e+00 : f32
    %221 = arith.subf %cst_63, %220 : f32
    %cst_64 = arith.constant 5.000000e-01 : f32
    %222 = arith.mulf %221, %cst_64 : f32
    %c5_i32 = arith.constant 5 : i32
    %223 = vector.broadcast %c5_i32 : i32 to vector<1x128xi32>
    %224 = arith.cmpi eq, %11, %223 : vector<1x128xi32>
    %cst_65 = arith.constant 0.000000e+00 : f32
    %225 = vector.broadcast %222 : f32 to vector<1x128xf32>
    %226 = vector.broadcast %cst_65 : f32 to vector<1x128xf32>
    %227 = arith.select %224, %225, %226 : vector<1x128xi1>, vector<1x128xf32>
    %228 = arith.addf %192, %227 : vector<1x128xf32>
    %229 = tpu.concatenate %34, %70, %106, %142, %178, %214 in 1 : vector<2x128xf32>, vector<2x128xf32>, vector<2x128xf32>, vector<2x128xf32>, vector<2x128xf32>, vector<2x128xf32> -> vector<2x768xf32>
    %c0_66 = arith.constant 0 : index
    %c0_67 = arith.constant 0 : index
    %230 = vector.load %arg5[%c0_66, %c0_67] : memref<2x768xf32, #tpu.memory_space<vmem>>, vector<2x768xf32>
    tpu.vector_store %arg5[%c0_66, %c0_67], %229 {strides = array<i32>} : memref<2x768xf32, #tpu.memory_space<vmem>>, vector<2x768xf32>,
    %c0_68 = arith.constant 0 : index
    %c0_69 = arith.constant 0 : index
    %231 = vector.load %arg6[%c0_68, %c0_69] : memref<1x128xf32, #tpu.memory_space<vmem>>, vector<1x128xf32>
    tpu.vector_store %arg6[%c0_68, %c0_69], %228 {strides = array<i32>} : memref<1x128xf32, #tpu.memory_space<vmem>>, vector<1x128xf32>,
    return
  }
}

</mosaic_0001>

<llo_original>
// kernel: tpu_custom_call.1
$region0: #{tpu_custom_call.1}
  #allocation0 [shape = 'u32[]', space=smem, size = 0x4, offset = 0x4, fixed_abs, tag = 'smem constant byte address 0x4 - core index']
  #allocation1 [shape = 'u32[144,128]{1,0:T(1,128)}', space=vmem, size = 0x12000, scoped, tag = 'internal scratch']
  %s0 = inlined_call_operand.hbm [shape: s32[6], index: 0, kind: input, shape index: {}]
  %s1 = inlined_call_operand.hbm [shape: f32[2,8,32], index: 1, kind: input, shape index: {}]
  %s2 = inlined_call_operand.hbm [shape: f32[32,768], index: 2, kind: input, shape index: {}]
  %s3 = inlined_call_operand.hbm [shape: f32[1,768], index: 3, kind: input, shape index: {}]
  %s4 = inlined_call_operand.vmem [shape: f32[2,768], index: 4, kind: input, shape index: {}]
  %s5 = inlined_call_operand.hbm [shape: f32[2,768], index: 5, kind: output, shape index: {0}]
  %s6 = inlined_call_operand.hbm [shape: f32[1,128], index: 6, kind: output, shape index: {1}]
  %7 = xla_tuple %s5, %s6
  %s8 = sld [smem:[#allocation0]]
  $region54: #{tpu_custom_call.1} parent=0
    _
  %s10 = ssub.s32 1, %s8
  %s11 = scalar_select 0, %s10, %s8
  $region1: #{tpu_custom_call.1} parent=0
    #allocation2 [shape = 'u8[512]{0}', space=smem, size = 0x200, scoped, tag = 'input window, operand 0, single buffered']
    #allocation3 [shape = 's32[1]{0}', space=sflag, size = 0x4, scoped, tag = 'scoped memory for tpu_custom_call.1']
    #allocation4 [shape = 's32[1]{0}', space=sflag, size = 0x4, scoped, tag = 'scoped memory for tpu_custom_call.1']
    #allocation5 [shape = 's32[1]{0}', space=sflag, size = 0x4, scoped, tag = 'scoped memory for tpu_custom_call.1']
    #allocation6 [shape = 'u8[8192]{0}', space=vmem, size = 0x2000, scoped, tag = 'input window, operand 1, single buffered']
    #allocation7 [shape = 'u8[98304]{0}', space=vmem, size = 0x18000, scoped, tag = 'input window, operand 2, single buffered']
    #allocation8 [shape = 's32[1]{0}', space=sflag, size = 0x4, scoped, tag = 'scoped memory for tpu_custom_call.1']
    #allocation9 [shape = 'u8[3072]{0}', space=vmem, size = 0xc00, scoped, tag = 'input window, operand 3, single buffered']
    #allocation10 [shape = 'u8[6144]{0}', space=vmem, size = 0x1800, scoped, tag = 'output window, operand 0, single buffered']
    #allocation11 [shape = 'u8[512]{0}', space=vmem, size = 0x400, scoped, tag = 'output window, operand 1, single buffered']
    #allocation12 [shape = 's32[1]{0}', space=sflag, size = 0x4, scoped, tag = 'scoped memory for tpu_custom_call.1']
    %12 = vsyncpa [#allocation5], 0
    %13 = vsyncpa [#allocation3], 0
    %14 = vsyncpa [#allocation8], 0
    %15 = vsyncpa [#allocation4], 0
    %16 = vsyncpa [#allocation12], 0
    // Predicated region
    $region2: #{tpu_custom_call.1} parent=1 // pred_check
      _
    $region3: #{tpu_custom_call.1} parent=1 // pred_check_branch
      %18 = sbr.rel (0) target = $region5
    $region4: #{tpu_custom_call.1} parent=1 // pred_region
      %s20 = ssub.s32 16, 16
      %21 = vsyncadd [#allocation5], %s20
      %24 = dma.hbm_to_smem %s0, 16, [#allocation2], [#allocation5]
    $region5: #{tpu_custom_call.1} parent=1 // pred_fallthru
      _
    // Predicated region
    $region6: #{tpu_custom_call.1} parent=1 // pred_check
      _
    $region7: #{tpu_custom_call.1} parent=1 // pred_check_branch
      %26 = sbr.rel (0) target = $region9
    $region8: #{tpu_custom_call.1} parent=1 // pred_region
      %s28 = ssub.s32 256, 256
      %29 = vsyncadd [#allocation3], %s28
      %s30 = sshll.u32 [#allocation6], 4
      %s31 = int_to_ptr.vmem [resolvable:$true] %s30
      %36 = dma.hbm_to_vmem [thread:$0]  %s1, 256, %s31, [#allocation3], 128, 128, 8
    $region9: #{tpu_custom_call.1} parent=1 // pred_fallthru
      _
    // Predicated region
    $region10: #{tpu_custom_call.1} parent=1 // pred_check
      _
    $region11: #{tpu_custom_call.1} parent=1 // pred_check_branch
      %38 = sbr.rel (0) target = $region13
    $region12: #{tpu_custom_call.1} parent=1 // pred_region
      %s40 = ssub.s32 3072, 3072
      %41 = vsyncadd [#allocation8], %s40
      %s42 = sshll.u32 [#allocation7], 4
      %s43 = int_to_ptr.vmem [resolvable:$true] %s42
      %48 = dma.hbm_to_vmem [thread:$0]  %s2, 3072, %s43, [#allocation8], 768, 768, 48
    $region13: #{tpu_custom_call.1} parent=1 // pred_fallthru
      _
    // Predicated region
    $region14: #{tpu_custom_call.1} parent=1 // pred_check
      _
    $region15: #{tpu_custom_call.1} parent=1 // pred_check_branch
      %50 = sbr.rel (0) target = $region17
    $region16: #{tpu_custom_call.1} parent=1 // pred_region
      %s52 = ssub.s32 96, 96
      %53 = vsyncadd [#allocation8], %s52
      %s55 = sshll.u32 [#allocation9], 4
      %s56 = int_to_ptr.vmem [resolvable:$true] %s55
      %58 = dma.hbm_to_vmem [thread:$0]  %s3, 96, %s56, [#allocation8]
    $region17: #{tpu_custom_call.1} parent=1 // pred_fallthru
      _
    // Predicated region
    $region18: #{tpu_custom_call.1} parent=1 // pred_check
      _
    $region19: #{tpu_custom_call.1} parent=1 // pred_check_branch
      %60 = sbr.rel (0) target = $region21
    $region20: #{tpu_custom_call.1} parent=1 // pred_region
      _
    $region21: #{tpu_custom_call.1} parent=1 // pred_fallthru
      _
    // Predicated region
    $region22: #{tpu_custom_call.1} parent=1 // pred_check
      _
    $region23: #{tpu_custom_call.1} parent=1 // pred_check_branch
      %62 = sbr.rel (0) target = $region25
    $region24: #{tpu_custom_call.1} parent=1 // pred_region
      %63 = dma.done [#allocation5], 16
    $region25: #{tpu_custom_call.1} parent=1 // pred_fallthru
      _
    // Predicated region
    $region26: #{tpu_custom_call.1} parent=1 // pred_check
      _
    $region27: #{tpu_custom_call.1} parent=1 // pred_check_branch
      %65 = sbr.rel (0) target = $region29
    $region28: #{tpu_custom_call.1} parent=1 // pred_region
      %66 = dma.done [#allocation3], 256
    $region29: #{tpu_custom_call.1} parent=1 // pred_fallthru
      _
    // Predicated region
    $region30: #{tpu_custom_call.1} parent=1 // pred_check
      _
    $region31: #{tpu_custom_call.1} parent=1 // pred_check_branch
      %68 = sbr.rel (0) target = $region33
    $region32: #{tpu_custom_call.1} parent=1 // pred_region
      %69 = dma.done [#allocation8], 3072
    $region33: #{tpu_custom_call.1} parent=1 // pred_fallthru
      _
    // Predicated region
    $region34: #{tpu_custom_call.1} parent=1 // pred_check
      _
    $region35: #{tpu_custom_call.1} parent=1 // pred_check_branch
      %71 = sbr.rel (0) target = $region37
    $region36: #{tpu_custom_call.1} parent=1 // pred_region
      %72 = dma.done [#allocation8], 96
    $region37: #{tpu_custom_call.1} parent=1 // pred_fallthru
      _
    %73 = sfence
    %v74 = vld [vmem:[#allocation6] sm:$0xff]
    %v75 = vld [vmem:[#allocation6 + $0x8] sm:$0xff]
    %vm76 = vcmask 261120
    %v77 = vsel %vm76, %v74, 0.0
    %v78 = vrot.slane %v77, 4
    %v79 = vadd.f32 %v77, %v78
    %v80 = vrot.slane %v79, 2
    %v81 = vadd.f32 %v79, %v80
    %v82 = vrot.slane %v81, 1
    %v83 = vadd.f32 %v81, %v82
    %v84 = vsel %vm76, %v75, 0.0
    %v85 = vrot.slane %v84, 4
    %v86 = vadd.f32 %v84, %v85
    %v87 = vrot.slane %v86, 2
    %v88 = vadd.f32 %v86, %v87
    %v89 = vrot.slane %v88, 1
    %v90 = vadd.f32 %v88, %v89
    %v91 = vmul.f32 %v83, 0.125
    %v92 = vmul.f32 %v90, 0.125
    %v93 = vld [vmem:[#allocation7] sm:$0xff]
    %v94 = vld [vmem:[#allocation7 + $0x8] sm:$0xff]
    %v95 = vld [vmem:[#allocation7 + $0x10] sm:$0xff]
    %v96 = vld [vmem:[#allocation7 + $0x18] sm:$0xff]
    %v97 = vld [vmem:[#allocation7 + $0x20] sm:$0xff]
    %v98 = vld [vmem:[#allocation7 + $0x28] sm:$0xff]
    %v99 = vld [vmem:[#allocation7 + $0x30] sm:$0xff]
    %v100 = vld [vmem:[#allocation7 + $0x38] sm:$0xff]
    %v101 = vld [vmem:[#allocation7 + $0x40] sm:$0xff]
    %v102 = vld [vmem:[#allocation7 + $0x48] sm:$0xff]
    %v103 = vld [vmem:[#allocation7 + $0x50] sm:$0xff]
    %v104 = vld [vmem:[#allocation7 + $0x58] sm:$0xff]
    %v105 = vld [vmem:[#allocation7 + $0x60] sm:$0xff]
    %v106 = vld [vmem:[#allocation7 + $0x68] sm:$0xff]
    %v107 = vld [vmem:[#allocation7 + $0x70] sm:$0xff]
    %v108 = vld [vmem:[#allocation7 + $0x78] sm:$0xff]
    %v109 = vld [vmem:[#allocation7 + $0x80] sm:$0xff]
    %v110 = vld [vmem:[#allocation7 + $0x88] sm:$0xff]
    %v111 = vld [vmem:[#allocation7 + $0x90] sm:$0xff]
    %v112 = vld [vmem:[#allocation7 + $0x98] sm:$0xff]
    %v113 = vld [vmem:[#allocation7 + $0xa0] sm:$0xff]
    %v114 = vld [vmem:[#allocation7 + $0xa8] sm:$0xff]
    %v115 = vld [vmem:[#allocation7 + $0xb0] sm:$0xff]
    %v116 = vld [vmem:[#allocation7 + $0xb8] sm:$0xff]
    %v117 = vld [vmem:[#allocation9] sm:$0x3f]
    %v119 = vlaneseq
    %v120 = vshrl.u32 %v119, 7
    %v121 = vsub.s32 0, %v120
    %v122 = vrot.slane %v117, %v121
    %v123 = vlaneseq
    %v124 = vshrl.u32 %v123, 7
    %v125 = vsub.s32 1, %v124
    %v126 = vrot.slane %v117, %v125
    %v127 = vlaneseq
    %v128 = vshrl.u32 %v127, 7
    %v129 = vsub.s32 2, %v128
    %v130 = vrot.slane %v117, %v129
    %v131 = vlaneseq
    %v132 = vshrl.u32 %v131, 7
    %v133 = vsub.s32 3, %v132
    %v134 = vrot.slane %v117, %v133
    %v135 = vlaneseq
    %v136 = vshrl.u32 %v135, 7
    %v137 = vsub.s32 4, %v136
    %v138 = vrot.slane %v117, %v137
    %v139 = vlaneseq
    %v140 = vshrl.u32 %v139, 7
    %v141 = vsub.s32 5, %v140
    %v142 = vrot.slane %v117, %v141
    %vm151 = vcmask 1041409
    %v152 = vsel %vm151, %v92, %v91
    %v153 = vsel %vm76, %v152, 0
    %155 = vmatprep.subr.mxu0 %v94
    %156 = vmatpush1.msra.mxu0 %v93
    %157 = vmatprep.subr.mxu0 %v100
    %158 = vmatpush1.msra.mxu0 %v99
    %159 = vmatprep.subr.mxu0 %v106
    %160 = vmatpush1.msra.mxu0 %v105
    %161 = vmatprep.subr.mxu0 %v112
    %162 = vmatpush1.msra.mxu0 %v111
    %163 = vmatprep.subr.mxu0 0.0
    %164 = vmatpush1.msra.mxu0 0.0
    %165 = vmatprep.subr.mxu0 0.0
    %166 = vmatpush1.msra.mxu0 0.0
    %167 = vmatprep.subr.mxu0 0.0
    %168 = vmatpush1.msra.mxu0 0.0
    %169 = vmatprep.subr.mxu0 0.0
    %170 = vmatpush1.msra.mxu0 0.0
    %171 = vmatprep.subr.mxu0 0.0
    %172 = vmatpush1.msra.mxu0 0.0
    %173 = vmatprep.subr.mxu0 0.0
    %174 = vmatpush1.msra.mxu0 0.0
    %175 = vmatprep.subr.mxu0 0.0
    %176 = vmatpush1.msra.mxu0 0.0
    %177 = vmatprep.subr.mxu0 0.0
    %178 = vmatpush1.msra.mxu0 0.0
    %179 = vmatprep.subr.mxu0 0.0
    %180 = vmatpush1.msra.mxu0 0.0
    %181 = vmatprep.subr.mxu0 0.0
    %182 = vmatpush1.msra.mxu0 0.0
    %183 = vmatprep.subr.mxu0 0.0
    %184 = vmatpush1.msra.mxu0 0.0
    %185 = vmatprep.subr.mxu0 0.0
    %186 = vmatpush1.msra.mxu0 0.0
    %187 = vmatprep.subr.mxu0 0.0
    %188 = vmatpush1.msra.mxu0 0.0
    %189 = vmatprep.subr.mxu0 0.0
    %190 = vmatpush1.msra.mxu0 0.0
    %191 = vmatprep.subr.mxu0 0.0
    %192 = vmatpush1.msra.mxu0 0.0
    %193 = vmatprep.subr.mxu0 0.0
    %194 = vmatpush1.msra.mxu0 0.0
    %195 = vmatprep.subr.mxu0 0.0
    %196 = vmatpush1.msra.mxu0 0.0
    %197 = vmatprep.subr.mxu0 0.0
    %198 = vmatpush1.msra.mxu0 0.0
    %199 = vmatprep.subr.mxu0 0.0
    %200 = vmatpush1.msra.mxu0 0.0
    %201 = vmatprep.subr.mxu0 0.0
    %202 = vmatpush1.msra.mxu0 0.0
    %203 = vmatprep.subr.mxu0 0.0
    %204 = vmatpush1.msra.mxu0 0.0
    %205 = vmatprep.subr.mxu0 0.0
    %206 = vmatpush1.msra.mxu0 0.0
    %207 = vmatprep.subr.mxu0 0.0
    %208 = vmatpush1.msra.mxu0 0.0
    %209 = vmatprep.subr.mxu0 0.0
    %210 = vmatpush1.msra.mxu0 0.0
    %211 = vmatprep.subr.mxu0 0.0
    %212 = vmatpush1.msra.mxu0 0.0
    %213 = vmatprep.subr.mxu0 0.0
    %214 = vmatpush1.msra.mxu0 0.0
    %215 = vmatprep.subr.mxu0 0.0
    %216 = vmatpush1.msra.mxu0 0.0
    %217 = vmatprep.subr.mxu0 0.0
    %218 = vmatpush1.msra.mxu0 0.0
    %219 = vmatprep.mubr.f32.mxu0 0.0
    %220 = vmatmul.mubr.f32.gmra.mrb[0].mxu0 %v153
    %v221 = vpop.f32.mrb[0].mxu0
    %v222 = vadd.f32 %v122, %v221
    %v223 = vpop.f32.mrb[0].mxu0
    %v224 = vadd.f32 %v126, %v223
    %225 = vdwg.mxu0
    %226 = vmatprep.subr.mxu0 %v96
    %227 = vmatpush1.msra.mxu0 %v95
    %228 = vmatprep.subr.mxu0 %v102
    %229 = vmatpush1.msra.mxu0 %v101
    %230 = vmatprep.subr.mxu0 %v108
    %231 = vmatpush1.msra.mxu0 %v107
    %232 = vmatprep.subr.mxu0 %v114
    %233 = vmatpush1.msra.mxu0 %v113
    %234 = vmatprep.subr.mxu0 0.0
    %235 = vmatpush1.msra.mxu0 0.0
    %236 = vmatprep.subr.mxu0 0.0
    %237 = vmatpush1.msra.mxu0 0.0
    %238 = vmatprep.subr.mxu0 0.0
    %239 = vmatpush1.msra.mxu0 0.0
    %240 = vmatprep.subr.mxu0 0.0
    %241 = vmatpush1.msra.mxu0 0.0
    %242 = vmatprep.subr.mxu0 0.0
    %243 = vmatpush1.msra.mxu0 0.0
    %244 = vmatprep.subr.mxu0 0.0
    %245 = vmatpush1.msra.mxu0 0.0
    %246 = vmatprep.subr.mxu0 0.0
    %247 = vmatpush1.msra.mxu0 0.0
    %248 = vmatprep.subr.mxu0 0.0
    %249 = vmatpush1.msra.mxu0 0.0
    %250 = vmatprep.subr.mxu0 0.0
    %251 = vmatpush1.msra.mxu0 0.0
    %252 = vmatprep.subr.mxu0 0.0
    %253 = vmatpush1.msra.mxu0 0.0
    %254 = vmatprep.subr.mxu0 0.0
    %255 = vmatpush1.msra.mxu0 0.0
    %256 = vmatprep.subr.mxu0 0.0
    %257 = vmatpush1.msra.mxu0 0.0
    %258 = vmatprep.subr.mxu0 0.0
    %259 = vmatpush1.msra.mxu0 0.0
    %260 = vmatprep.subr.mxu0 0.0
    %261 = vmatpush1.msra.mxu0 0.0
    %262 = vmatprep.subr.mxu0 0.0
    %263 = vmatpush1.msra.mxu0 0.0
    %264 = vmatprep.subr.mxu0 0.0
    %265 = vmatpush1.msra.mxu0 0.0
    %266 = vmatprep.subr.mxu0 0.0
    %267 = vmatpush1.msra.mxu0 0.0
    %268 = vmatprep.subr.mxu0 0.0
    %269 = vmatpush1.msra.mxu0 0.0
    %270 = vmatprep.subr.mxu0 0.0
    %271 = vmatpush1.msra.mxu0 0.0
    %272 = vmatprep.subr.mxu0 0.0
    %273 = vmatpush1.msra.mxu0 0.0
    %274 = vmatprep.subr.mxu0 0.0
    %275 = vmatpush1.msra.mxu0 0.0
    %276 = vmatprep.subr.mxu0 0.0
    %277 = vmatpush1.msra.mxu0 0.0
    %278 = vmatprep.subr.mxu0 0.0
    %279 = vmatpush1.msra.mxu0 0.0
    %280 = vmatprep.subr.mxu0 0.0
    %281 = vmatpush1.msra.mxu0 0.0
    %282 = vmatprep.subr.mxu0 0.0
    %283 = vmatpush1.msra.mxu0 0.0
    %284 = vmatprep.subr.mxu0 0.0
    %285 = vmatpush1.msra.mxu0 0.0
    %286 = vmatprep.subr.mxu0 0.0
    %287 = vmatpush1.msra.mxu0 0.0
    %288 = vmatprep.subr.mxu0 0.0
    %289 = vmatpush1.msra.mxu0 0.0
    %290 = vmatprep.mubr.f32.mxu0 0.0
    %291 = vmatmul.mubr.f32.gmra.mrb[0].mxu0 %v153
    %v292 = vpop.f32.mrb[0].mxu0
    %v293 = vadd.f32 %v130, %v292
    %v294 = vpop.f32.mrb[0].mxu0
    %v295 = vadd.f32 %v134, %v294
    %296 = vdwg.mxu0
    %297 = vmatprep.subr.mxu0 %v98
    %298 = vmatpush1.msra.mxu0 %v97
    %299 = vmatprep.subr.mxu0 %v104
    %300 = vmatpush1.msra.mxu0 %v103
    %301 = vmatprep.subr.mxu0 %v110
    %302 = vmatpush1.msra.mxu0 %v109
    %303 = vmatprep.subr.mxu0 %v116
    %304 = vmatpush1.msra.mxu0 %v115
    %305 = vmatprep.subr.mxu0 0.0
    %306 = vmatpush1.msra.mxu0 0.0
    %307 = vmatprep.subr.mxu0 0.0
    %308 = vmatpush1.msra.mxu0 0.0
    %309 = vmatprep.subr.mxu0 0.0
    %310 = vmatpush1.msra.mxu0 0.0
    %311 = vmatprep.subr.mxu0 0.0
    %312 = vmatpush1.msra.mxu0 0.0
    %313 = vmatprep.subr.mxu0 0.0
    %314 = vmatpush1.msra.mxu0 0.0
    %315 = vmatprep.subr.mxu0 0.0
    %316 = vmatpush1.msra.mxu0 0.0
    %317 = vmatprep.subr.mxu0 0.0
    %318 = vmatpush1.msra.mxu0 0.0
    %319 = vmatprep.subr.mxu0 0.0
    %320 = vmatpush1.msra.mxu0 0.0
    %321 = vmatprep.subr.mxu0 0.0
    %322 = vmatpush1.msra.mxu0 0.0
    %323 = vmatprep.subr.mxu0 0.0
    %324 = vmatpush1.msra.mxu0 0.0
    %325 = vmatprep.subr.mxu0 0.0
    %326 = vmatpush1.msra.mxu0 0.0
    %327 = vmatprep.subr.mxu0 0.0
    %328 = vmatpush1.msra.mxu0 0.0
    %329 = vmatprep.subr.mxu0 0.0
    %330 = vmatpush1.msra.mxu0 0.0
    %331 = vmatprep.subr.mxu0 0.0
    %332 = vmatpush1.msra.mxu0 0.0
    %333 = vmatprep.subr.mxu0 0.0
    %334 = vmatpush1.msra.mxu0 0.0
    %335 = vmatprep.subr.mxu0 0.0
    %336 = vmatpush1.msra.mxu0 0.0
    %337 = vmatprep.subr.mxu0 0.0
    %338 = vmatpush1.msra.mxu0 0.0
    %339 = vmatprep.subr.mxu0 0.0
    %340 = vmatpush1.msra.mxu0 0.0
    %341 = vmatprep.subr.mxu0 0.0
    %342 = vmatpush1.msra.mxu0 0.0
    %343 = vmatprep.subr.mxu0 0.0
    %344 = vmatpush1.msra.mxu0 0.0
    %345 = vmatprep.subr.mxu0 0.0
    %346 = vmatpush1.msra.mxu0 0.0
    %347 = vmatprep.subr.mxu0 0.0
    %348 = vmatpush1.msra.mxu0 0.0
    %349 = vmatprep.subr.mxu0 0.0
    %350 = vmatpush1.msra.mxu0 0.0
    %351 = vmatprep.subr.mxu0 0.0
    %352 = vmatpush1.msra.mxu0 0.0
    %353 = vmatprep.subr.mxu0 0.0
    %354 = vmatpush1.msra.mxu0 0.0
    %355 = vmatprep.subr.mxu0 0.0
    %356 = vmatpush1.msra.mxu0 0.0
    %357 = vmatprep.subr.mxu0 0.0
    %358 = vmatpush1.msra.mxu0 0.0
    %359 = vmatprep.subr.mxu0 0.0
    %360 = vmatpush1.msra.mxu0 0.0
    %361 = vmatprep.mubr.f32.mxu0 0.0
    %362 = vmatmul.mubr.f32.gmra.mrb[0].mxu0 %v153
    %v363 = vpop.f32.mrb[0].mxu0
    %v364 = vadd.f32 %v138, %v363
    %v365 = vpop.f32.mrb[0].mxu0
    %v366 = vadd.f32 %v142, %v365
    %367 = vdwg.mxu0
    %v368 = vld [vmem:[%s4] sm:$0xff]
    %v369 = vld [vmem:[%s4 + $0x8] sm:$0xf]
    %v370 = vlaneseq
    %v371 = vand.u32 %v370, 127
    %s372 = sld [smem:[#allocation2]]
    %v373 = vstv %s372
    %vm374 = vcmp.lt.s32.totalorder %v371, %v373
    %v375 = vsel %vm374, %v222, -1e+30
    %vm376 = vcmask 1041408
    %v377 = vsel %vm376, %v375, -inf
    %378 = vmax.xlane.f32.xlu0 %v377
    %v379 = vpop.xlane.xlu0 %378
    %v380 = vsub.f32 %v375, %v379
    %v381 = vmul.f32 %v380, 1.442695
    %v382 = vpow.pop %v381
    %v383 = vsel %vm374, %v382, 0.0
    %v384 = vsel %vm376, %v383, 0.0
    %385 = vadd.xlane.f32.xlu0 %v384
    %v386 = vpop.xlane.xlu0 %385
    %v387 = vlog2.pop %v386
    %v388 = vmul.f32 %v387, 0.6931472
    %v389 = vsub.f32 %v380, %v388
    %v390 = vsel %vm374, %v389, 0.0
    %v391 = vmul.f32 %v389, %v368
    %v392 = vsel %vm376, %v391, 0.0
    %393 = vadd.xlane.f32.xlu0 %v392
    %v394 = vpop.xlane.xlu0 %393
    %v395 = vrot.slane %v394, 4
    %v396 = vadd.f32 %v394, %v395
    %v397 = vrot.slane %v396, 2
    %v398 = vadd.f32 %v396, %v397
    %v399 = vrot.slane %v398, 1
    %v400 = vadd.f32 %v398, %v399
    %s401 = vtos %v400
    %s402 = ssub.f32 0.0, %s401
    %s403 = smul.f32 %s402, 0.5
    %vm404 = vcmp.eq.s32.totalorder %v371, 0
    %v405 = vstv %s403
    %v406 = vsel %vm404, %v405, 0.0
    %v407 = vadd.f32 %v406, 0.0
    %s408 = sld [smem:[#allocation2 + $0x1]]
    %v409 = vstv %s408
    %vm410 = vcmp.lt.s32.totalorder %v371, %v409
    %v411 = vsel %vm410, %v224, -1e+30
    %v412 = vsel %vm376, %v411, -inf
    %413 = vmax.xlane.f32.xlu0 %v412
    %v414 = vpop.xlane.xlu0 %413
    %v415 = vsub.f32 %v411, %v414
    %v416 = vmul.f32 %v415, 1.442695
    %v417 = vpow.pop %v416
    %v418 = vsel %vm410, %v417, 0.0
    %v419 = vsel %vm376, %v418, 0.0
    %420 = vadd.xlane.f32.xlu0 %v419
    %v421 = vpop.xlane.xlu0 %420
    %v422 = vlog2.pop %v421
    %v423 = vmul.f32 %v422, 0.6931472
    %v424 = vsub.f32 %v415, %v423
    %v425 = vsel %vm410, %v424, 0.0
    %v428 = vunpack.c.l.s4 1983009808
    %v429 = vunpack.c.0.s8 %v428
    %v430 = vlaneseq
    %v431 = vshrl.u32 %v430, 7
    %v432 = vsub.s32 %v429, %v431
    %v433 = vrot.slane %v368, %v432
    %v434 = vcombine.high %v433, %v433
    %v436 = vmul.f32 %v424, %v434
    %v437 = vsel %vm376, %v436, 0.0
    %438 = vadd.xlane.f32.xlu0 %v437
    %v439 = vpop.xlane.xlu0 %438
    %v440 = vrot.slane %v439, 4
    %v441 = vadd.f32 %v439, %v440
    %v442 = vrot.slane %v441, 2
    %v443 = vadd.f32 %v441, %v442
    %v444 = vrot.slane %v443, 1
    %v445 = vadd.f32 %v443, %v444
    %s446 = vtos %v445
    %s447 = ssub.f32 0.0, %s446
    %s448 = smul.f32 %s447, 0.5
    %vm449 = vcmp.eq.s32.totalorder %v371, 1
    %v450 = vstv %s448
    %v451 = vsel %vm449, %v450, 0.0
    %v452 = vadd.f32 %v407, %v451
    %s453 = sld [smem:[#allocation2 + $0x2]]
    %v454 = vstv %s453
    %vm455 = vcmp.lt.s32.totalorder %v371, %v454
    %v456 = vsel %vm455, %v293, -1e+30
    %v457 = vsel %vm376, %v456, -inf
    %458 = vmax.xlane.f32.xlu0 %v457
    %v459 = vpop.xlane.xlu0 %458
    %v460 = vsub.f32 %v456, %v459
    %v461 = vmul.f32 %v460, 1.442695
    %v462 = vpow.pop %v461
    %v463 = vsel %vm455, %v462, 0.0
    %v464 = vsel %vm376, %v463, 0.0
    %465 = vadd.xlane.f32.xlu0 %v464
    %v466 = vpop.xlane.xlu0 %465
    %v467 = vlog2.pop %v466
    %v468 = vmul.f32 %v467, 0.6931472
    %v469 = vsub.f32 %v460, %v468
    %v470 = vsel %vm455, %v469, 0.0
    %v471 = vcombine.high %v368, %v368
    %v473 = vunpack.c.l.s4 1983009808
    %v474 = vunpack.c.0.s8 %v473
    %v475 = vlaneseq
    %v476 = vshrl.u32 %v475, 7
    %v477 = vsub.s32 %v474, %v476
    %v478 = vrot.slane %v471, %v477
    %v480 = vmul.f32 %v469, %v478
    %v481 = vsel %vm376, %v480, 0.0
    %482 = vadd.xlane.f32.xlu0 %v481
    %v483 = vpop.xlane.xlu0 %482
    %v484 = vrot.slane %v483, 4
    %v485 = vadd.f32 %v483, %v484
    %v486 = vrot.slane %v485, 2
    %v487 = vadd.f32 %v485, %v486
    %v488 = vrot.slane %v487, 1
    %v489 = vadd.f32 %v487, %v488
    %s490 = vtos %v489
    %s491 = ssub.f32 0.0, %s490
    %s492 = smul.f32 %s491, 0.5
    %vm493 = vcmp.eq.s32.totalorder %v371, 2
    %v494 = vstv %s492
    %v495 = vsel %vm493, %v494, 0.0
    %v496 = vadd.f32 %v452, %v495
    %s497 = sld [smem:[#allocation2 + $0x3]]
    %v498 = vstv %s497
    %vm499 = vcmp.lt.s32.totalorder %v371, %v498
    %v500 = vsel %vm499, %v295, -1e+30
    %v501 = vsel %vm376, %v500, -inf
    %502 = vmax.xlane.f32.xlu0 %v501
    %v503 = vpop.xlane.xlu0 %502
    %v504 = vsub.f32 %v500, %v503
    %v505 = vmul.f32 %v504, 1.442695
    %v506 = vpow.pop %v505
    %v507 = vsel %vm499, %v506, 0.0
    %v508 = vsel %vm376, %v507, 0.0
    %509 = vadd.xlane.f32.xlu0 %v508
    %v510 = vpop.xlane.xlu0 %509
    %v511 = vlog2.pop %v510
    %v512 = vmul.f32 %v511, 0.6931472
    %v513 = vsub.f32 %v504, %v512
    %v514 = vsel %vm499, %v513, 0.0
    %v515 = vcombine.high %v478, %v478
    %v517 = vmul.f32 %v513, %v515
    %v518 = vsel %vm376, %v517, 0.0
    %519 = vadd.xlane.f32.xlu0 %v518
    %v520 = vpop.xlane.xlu0 %519
    %v521 = vrot.slane %v520, 4
    %v522 = vadd.f32 %v520, %v521
    %v523 = vrot.slane %v522, 2
    %v524 = vadd.f32 %v522, %v523
    %v525 = vrot.slane %v524, 1
    %v526 = vadd.f32 %v524, %v525
    %s527 = vtos %v526
    %s528 = ssub.f32 0.0, %s527
    %s529 = smul.f32 %s528, 0.5
    %vm530 = vcmp.eq.s32.totalorder %v371, 3
    %v531 = vstv %s529
    %v532 = vsel %vm530, %v531, 0.0
    %v533 = vadd.f32 %v496, %v532
    %s534 = sld [smem:[#allocation2 + $0x4]]
    %v535 = vstv %s534
    %vm536 = vcmp.lt.s32.totalorder %v371, %v535
    %v537 = vsel %vm536, %v364, -1e+30
    %v538 = vsel %vm376, %v537, -inf
    %539 = vmax.xlane.f32.xlu0 %v538
    %v540 = vpop.xlane.xlu0 %539
    %v541 = vsub.f32 %v537, %v540
    %v542 = vmul.f32 %v541, 1.442695
    %v543 = vpow.pop %v542
    %v544 = vsel %vm536, %v543, 0.0
    %v545 = vsel %vm376, %v544, 0.0
    %546 = vadd.xlane.f32.xlu0 %v545
    %v547 = vpop.xlane.xlu0 %546
    %v548 = vlog2.pop %v547
    %v549 = vmul.f32 %v548, 0.6931472
    %v550 = vsub.f32 %v541, %v549
    %v551 = vsel %vm536, %v550, 0.0
    %v552 = vmul.f32 %v550, %v369
    %v553 = vsel %vm376, %v552, 0.0
    %554 = vadd.xlane.f32.xlu0 %v553
    %v555 = vpop.xlane.xlu0 %554
    %v556 = vrot.slane %v555, 4
    %v557 = vadd.f32 %v555, %v556
    %v558 = vrot.slane %v557, 2
    %v559 = vadd.f32 %v557, %v558
    %v560 = vrot.slane %v559, 1
    %v561 = vadd.f32 %v559, %v560
    %s562 = vtos %v561
    %s563 = ssub.f32 0.0, %s562
    %s564 = smul.f32 %s563, 0.5
    %vm565 = vcmp.eq.s32.totalorder %v371, 4
    %v566 = vstv %s564
    %v567 = vsel %vm565, %v566, 0.0
    %v568 = vadd.f32 %v533, %v567
    %s569 = sld [smem:[#allocation2 + $0x5]]
    %v570 = vstv %s569
    %vm571 = vcmp.lt.s32.totalorder %v371, %v570
    %v572 = vsel %vm571, %v366, -1e+30
    %v573 = vsel %vm376, %v572, -inf
    %574 = vmax.xlane.f32.xlu0 %v573
    %v575 = vpop.xlane.xlu0 %574
    %v576 = vsub.f32 %v572, %v575
    %v577 = vmul.f32 %v576, 1.442695
    %v578 = vpow.pop %v577
    %v579 = vsel %vm571, %v578, 0.0
    %v580 = vsel %vm376, %v579, 0.0
    %581 = vadd.xlane.f32.xlu0 %v580
    %v582 = vpop.xlane.xlu0 %581
    %v583 = vlog2.pop %v582
    %v584 = vmul.f32 %v583, 0.6931472
    %v585 = vsub.f32 %v576, %v584
    %v586 = vsel %vm571, %v585, 0.0
    %v589 = vunpack.c.l.s4 1983009808
    %v590 = vunpack.c.0.s8 %v589
    %v591 = vlaneseq
    %v592 = vshrl.u32 %v591, 7
    %v593 = vsub.s32 %v590, %v592
    %v594 = vrot.slane %v369, %v593
    %v595 = vcombine.high %v594, %v594
    %v597 = vmul.f32 %v585, %v595
    %v598 = vsel %vm376, %v597, 0.0
    %599 = vadd.xlane.f32.xlu0 %v598
    %v600 = vpop.xlane.xlu0 %599
    %v601 = vrot.slane %v600, 4
    %v602 = vadd.f32 %v600, %v601
    %v603 = vrot.slane %v602, 2
    %v604 = vadd.f32 %v602, %v603
    %v605 = vrot.slane %v604, 1
    %v606 = vadd.f32 %v604, %v605
    %s607 = vtos %v606
    %s608 = ssub.f32 0.0, %s607
    %s609 = smul.f32 %s608, 0.5
    %vm610 = vcmp.eq.s32.totalorder %v371, 5
    %v611 = vstv %s609
    %v612 = vsel %vm610, %v611, 0.0
    %v613 = vadd.f32 %v568, %v612
    %v620 = vcombine.low %v390, %v425
    %v621 = vcombine.low %v470, %v514
    %v623 = vunpack.c.l.s4 1983009808
    %v624 = vunpack.c.0.s8 %v623
    %v625 = vlaneseq
    %v626 = vshrl.u32 %v625, 7
    %v627 = vsub.s32 %v624, %v626
    %v628 = vrot.slane %v620, %v627
    %v630 = vunpack.c.l.s4 1983009808
    %v631 = vunpack.c.0.s8 %v630
    %v632 = vlaneseq
    %v633 = vshrl.u32 %v632, 7
    %v634 = vsub.s32 %v631, %v633
    %v635 = vrot.slane %v621, %v634
    %v636 = vcombine.low %v628, %v635
    %v637 = vcombine.low %v551, %v586
    %v639 = vunpack.c.l.s4 1983009808
    %v640 = vunpack.c.0.s8 %v639
    %v641 = vlaneseq
    %v642 = vshrl.u32 %v641, 7
    %v643 = vsub.s32 %v640, %v642
    %v644 = vrot.slane %v637, %v643
    %647 = vst [vmem:[#allocation10] sm:$0xff] %v636
    %648 = vst [vmem:[#allocation10 + $0x8] sm:$0xf] %v644
    %649 = vst [vmem:[#allocation11] sm:$0x1] %v613
    // Predicated region
    $region38: #{tpu_custom_call.1} parent=1 // pred_check
      _
    $region39: #{tpu_custom_call.1} parent=1 // pred_check_branch
      %651 = sbr.rel (0) target = $region41
    $region40: #{tpu_custom_call.1} parent=1 // pred_region
      %s653 = ssub.s32 192, 192
      %654 = vsyncadd [#allocation4], %s653
      %s656 = sshll.u32 [#allocation10], 4
      %s657 = int_to_ptr.vmem [resolvable:$true] %s656
      %659 = dma.vmem_to_hbm [thread:$0]  %s657, 192, %s5, [#allocation4]
    $region41: #{tpu_custom_call.1} parent=1 // pred_fallthru
      _
    // Predicated region
    $region42: #{tpu_custom_call.1} parent=1 // pred_check
      _
    $region43: #{tpu_custom_call.1} parent=1 // pred_check_branch
      %661 = sbr.rel (0) target = $region45
    $region44: #{tpu_custom_call.1} parent=1 // pred_region
      %s663 = ssub.s32 16, 16
      %664 = vsyncadd [#allocation12], %s663
      %s666 = sshll.u32 [#allocation11], 4
      %s667 = int_to_ptr.vmem [resolvable:$true] %s666
      %669 = dma.vmem_to_hbm [thread:$0]  %s667, 16, %s6, [#allocation12]
    $region45: #{tpu_custom_call.1} parent=1 // pred_fallthru
      _
    // Predicated region
    $region46: #{tpu_custom_call.1} parent=1 // pred_check
      _
    $region47: #{tpu_custom_call.1} parent=1 // pred_check_branch
      %671 = sbr.rel (0) target = $region49
    $region48: #{tpu_custom_call.1} parent=1 // pred_region
      %672 = dma.done [#allocation4], 192
    $region49: #{tpu_custom_call.1} parent=1 // pred_fallthru
      _
    // Predicated region
    $region50: #{tpu_custom_call.1} parent=1 // pred_check
      _
    $region51: #{tpu_custom_call.1} parent=1 // pred_check_branch
      %674 = sbr.rel (0) target = $region53
    $region52: #{tpu_custom_call.1} parent=1 // pred_region
      %675 = dma.done [#allocation12], 16
    $region53: #{tpu_custom_call.1} parent=1 // pred_fallthru
      _
    %676 = vsyncpa [#allocation3], 1
    %677 = vsyncpa [#allocation8], 1
    %678 = vsyncpa [#allocation4], 1
    %679 = vsyncpa [#allocation12], 1
    %680 = vsyncpa [#allocation5], 1

</llo_original>
